<compile_context>
chip_gen: v7x
topology: tpu7x:2x2x1
jax: 0.10.0
libtpu: 0.0.40
codegen_flags: <defaults>
</compile_context>

<pallas_src>
import functools

import jax
import jax.numpy as jnp
from jax import lax
from jax.experimental import pallas as pl
from jax.experimental.pallas import tpu as pltpu


def _round_up(x, m):
    return ((x + m - 1) // m) * m


def _pick_capsules_per_block(num_capsules, dn):
    """Smallest divisor of N giving an MXU-friendly (>=128) matmul M-dim and
    (8,128)-aligned blocks; falls back to a single block (block == full array)."""
    for cpb in range(1, num_capsules + 1):
        if num_capsules % cpb:
            continue
        if (cpb * dn) % 8:
            continue
        if 2 * cpb * dn >= 128:
            return cpb
    return num_capsules


# -------------------- fused conv + primary capsules + routing --------------------
def _capsnet_kernel(w_ref, cols_ref, out_ref, *, m_rows, iterations):
    # w_ref:    (2*m_rows, R_pad)  rows [0:m_rows]        = c-folded weights (-> s0)
    #                              rows [m_rows:2*m_rows] = plain weights    (-> usum)
    # cols_ref: (R_pad, L_pad)     im2col slab + masked bias row; batch folded
    #                              into the contraction dim.
    # out_ref:  (m_rows, L_pad)    v for this block of capsules (lane-dense).
    su = jnp.dot(w_ref[...], cols_ref[...], preferred_element_type=jnp.float32)
    s0 = su[:m_rows, :]      # (c * u).sum over batch at iteration 0
    usum = su[m_rows:, :]    # u.sum over batch
    # Padded lanes (l >= L) are exactly 0 in both (zero slab cols + masked bias
    # row), so the squash norm over L is uncontaminated and they stay 0 throughout.

    eps = 1e-12
    s = s0
    v = s0
    for t in range(iterations):                                   # 3 iters, unrolled
        # squash along L: v = (|s|^2/(1+|s|^2)) * s/|s|; divides moved to the EUP.
        sq = jnp.sum(s * s, axis=-1, keepdims=True)               # (m_rows, 1)
        scale = sq * pl.reciprocal(1.0 + sq, approx=True) * lax.rsqrt(sq + eps)
        v = scale * s
        if t < iterations - 1:
            # PyTorch: u_hat <- u + v*(u*s).sum(1); s <- (c*u_hat).sum(1).
            # softmax over batch sums to 1 and s is batch-independent, so exactly:
            s = s0 + v * (usum * s)
    out_ref[...] = v.astype(out_ref.dtype)


# ------------------------------------ wrapper ------------------------------------
def conv_capsnet1d_forward(x, params, *, stride=1, padding=0, iterations=3,
                           matmul_dtype=jnp.bfloat16):
    conv_w = params["conv_w"].astype(jnp.float32)   # (C_out, C_in, K)
    conv_b = params["conv_b"].astype(jnp.float32)   # (C_out,)
    caps_w = params["caps_w"].astype(jnp.float32)   # (N, D, C_out, 1)
    caps_b = params["caps_b"].astype(jnp.float32)   # (N, D)
    W = params["W"].astype(jnp.float32)             # (N, C_in, D, 1, 1)

    if stride != 1:
        # TODO(synk): generalize the im2col construction for stride > 1.
        raise NotImplementedError("stride > 1 not implemented in the Pallas kernel")

    B, C_in, L_in = x.shape
    C_out, _, K = conv_w.shape
    N, D = caps_w.shape[0], caps_w.shape[1]
    DN = D * N
    assert B == C_in, ("The PyTorch module's routing broadcast (W: (N,C_in,D,1,1) "
                       "against u: (B,D,N,L)) requires batch == in_channels")

    xp = jnp.pad(x.astype(jnp.float32), ((0, 0), (0, 0), (padding, padding)))
    L = (L_in + 2 * padding) - K + 1
    L_pad = _round_up(max(L, 1), 128)            # lane-dense last dim (>= 128)

    KC = K * C_in
    R = KC * B + 1                               # data rows + masked bias row
    R_pad = _round_up(R, 128)                    # MXU contraction dim (128-multiple)

    # ---- one-time parameter folding (independent of activations) ----
    # rows dm = d*N + m  (matches PyTorch u[b, d, m, l] flattening order)
    wcap = jnp.transpose(caps_w[:, :, :, 0], (1, 0, 2)).reshape(DN, C_out)   # (DN, C_out)
    bcap = jnp.transpose(caps_b, (1, 0)).reshape(DN)                          # (DN,)
    # Wf[dm, k*C_in + cin] = sum_o caps_w[m,d,o] * conv_w[o,cin,k]
    wf = jnp.concatenate([wcap @ conv_w[:, :, k] for k in range(K)], axis=1)  # (DN, KC)
    bf = wcap @ conv_b + bcap                                                  # (DN,)

    # routing coefficients softmax'ed over batch(==C_in), expanded over m
    c = jax.nn.softmax(W[:, :, :, 0, 0], axis=1)                  # (N, B, D)
    cdm = jnp.repeat(jnp.transpose(c, (0, 2, 1)), N, axis=1)      # (N, DN, B)

    # c-folded weights:  W'_n[dm, (k*C_in+cin)*B + b] = c[n,dm,b] * Wf[dm, k*C_in+cin]
    wprime = (wf[None, :, :, None] * cdm[:, :, None, :]).reshape(N, DN, KC * B)
    wprime = jnp.concatenate(
        [wprime, jnp.broadcast_to(bf[None, :, None], (N, DN, 1))], axis=2)      # (N, DN, R)
    # un-weighted weights for usum = sum_b u_b (bias picks up a factor of B)
    wsum = jnp.concatenate([jnp.repeat(wf, B, axis=1), (B * bf)[:, None]], axis=1)  # (DN, R)

    wprime = jnp.pad(wprime, ((0, 0), (0, 0), (0, R_pad - R)))
    wsum = jnp.pad(wsum, ((0, 0), (0, R_pad - R)))

    # ---- capsule blocking: grid over capsules, cpb capsules per step ----
    cpb = _pick_capsules_per_block(N, DN)
    G = N // cpb
    M = cpb * DN                                  # matmul rows per kind (s0 / usum)
    wall = jnp.concatenate(
        [jnp.concatenate([wprime[i * cpb:(i + 1) * cpb].reshape(M, R_pad),
                          jnp.tile(wsum, (cpb, 1))], axis=0)
         for i in range(G)], axis=0)              # (G * 2M, R_pad)

    # ---- im2col slab: batch folded into the CONTRACTION dim, lanes = L_pad ----
    # cols2[(k*C_in + cin)*B + b, l] = xp[b, cin, l + k]; last data row is the
    # bias/validity mask (1 for l < L, 0 on padded lanes).
    # TODO(synk): at production seq_len, build this slab in-kernel from the raw
    # padded input (cuts input HBM traffic ~K x) and tile L with a two-pass /
    # online reduction (the squash norm couples all of L).
    shifted = jnp.stack([xp[:, :, k:k + L] for k in range(K)], axis=0)          # (K, B, C_in, L)
    data = jnp.transpose(shifted, (0, 2, 1, 3)).reshape(KC * B, L)              # (KC*B, L)
    cols2 = jnp.concatenate([data, jnp.ones((1, L), jnp.float32)], axis=0)      # (R, L)
    cols2 = jnp.pad(cols2, ((0, R_pad - R), (0, L_pad - L)))                    # (R_pad, L_pad)

    v_flat = pl.pallas_call(
        functools.partial(_capsnet_kernel, m_rows=M, iterations=iterations),
        out_shape=jax.ShapeDtypeStruct((N * DN, L_pad), jnp.float32),
        grid=(G,),
        in_specs=[
            pl.BlockSpec((2 * M, R_pad), lambda i: (i, 0)),    # per-block folded weights
            pl.BlockSpec((R_pad, L_pad), lambda i: (0, 0)),    # same block -> stays resident
        ],
        out_specs=pl.BlockSpec((M, L_pad), lambda i: (i, 0)),  # lane-dense stores
        compiler_params=pltpu.CompilerParams(
            dimension_semantics=("parallel",),                 # megacore sharding on v7x
            # explicit budget: v5e scoped default is 16 MiB, v7x has 64 MiB physical;
            # all resident buffers here are far below this.
            vmem_limit_bytes=32 * 1024 * 1024),
    )(wall.astype(matmul_dtype), cols2.astype(matmul_dtype))

    # (N*D*N, L_pad) -> (N, D, N, L)  == PyTorch v.squeeze(dim=1)
    return v_flat.reshape(N, D, N, L_pad)[..., :L]


# ---------------- pure-JAX reference (literal PyTorch semantics) ----------------
def reference_forward(x, params, *, padding=0, iterations=3):
    conv_w, conv_b = params["conv_w"], params["conv_b"]
    caps_w, caps_b = params["caps_w"], params["caps_b"]
    W = params["W"]
    N = caps_w.shape[0]
    K = conv_w.shape[2]
    xp = jnp.pad(x, ((0, 0), (0, 0), (padding, padding)))
    L = xp.shape[-1] - K + 1
    cols = jnp.stack([xp[:, :, k:k + L] for k in range(K)], axis=-1)        # (B, C_in, L, K)
    x1 = jnp.einsum('oik,bilk->bol', conv_w, cols) + conv_b[None, :, None]
    u = jnp.stack([jnp.einsum('dc,bcl->bdl', caps_w[m, :, :, 0], x1)
                   + caps_b[m][None, :, None] for m in range(N)], axis=2)   # (B, D, N, L)
    c = jax.nn.softmax(W, axis=1)                                           # (N, C_in, D, 1, 1)
    u_hat = u                                                               # detach() == identity fwd
    v = None
    for t in range(iterations):
        s = jnp.sum(c * u_hat, axis=1, keepdims=True)
        norm = jnp.sqrt(jnp.sum(s * s, axis=-1, keepdims=True))
        scale = norm ** 2 / (1 + norm ** 2)
        v = scale * s / norm
        if t < iterations - 1:
            r = jnp.sum(u * s, axis=1, keepdims=True)
            u_hat = u + v * r
    return jnp.squeeze(v, axis=1)                                           # (N, D, N, L)


if __name__ == "__main__":
    in_channels, out_channels = 4, 8
    num_capsules, capsule_dim = 4, 8
    kernel_size = 3
    batch = in_channels        # required by the module's broadcasting (see assert)
    seq_in = 16

    keys = jax.random.split(jax.random.PRNGKey(0), 6)
    params = {
        "conv_w": 0.3 * jax.random.normal(keys[0], (out_channels, in_channels, kernel_size), jnp.float32),
        "conv_b": 0.1 * jax.random.normal(keys[1], (out_channels,), jnp.float32),
        "caps_w": 0.3 * jax.random.normal(keys[2], (num_capsules, capsule_dim, out_channels, 1), jnp.float32),
        "caps_b": 0.1 * jax.random.normal(keys[3], (num_capsules, capsule_dim), jnp.float32),
        "W": jax.random.normal(keys[4], (num_capsules, in_channels, capsule_dim, 1, 1), jnp.float32),
    }
    x = jax.random.normal(keys[5], (batch, in_channels, seq_in), jnp.float32)

    # default path: bf16 MXU operands, f32 accumulation / routing math
    out = jax.block_until_ready(conv_capsnet1d_forward(x, params))
    L_out = seq_in - kernel_size + 1
    assert out.shape == (num_capsules, capsule_dim, num_capsules, L_out), out.shape

    ref = reference_forward(x, params)

    # tight semantic check with f32 matmul operands (approx-reciprocal squash only)
    out_f32 = jax.block_until_ready(
        conv_capsnet1d_forward(x, params, matmul_dtype=jnp.float32))
    err_f32 = float(jnp.max(jnp.abs(out_f32 - ref)))
    assert jnp.allclose(out_f32, ref, atol=1e-2, rtol=1e-2), f"f32 max abs err {err_f32}"

    # looser check for the bf16-operand fast path (bf16 rounding of x / folded weights)
    err_bf16 = float(jnp.max(jnp.abs(out - ref)))
    assert jnp.allclose(out, ref, atol=1e-1, rtol=1e-1), f"bf16 max abs err {err_bf16}"

    print("KERNEL_OK")
</pallas_src>

<mosaic_0001>
module attributes {stable_mosaic.version = 11 : i64} {
  func.func @_capsnet_kernel(%arg0: i32, %arg1: memref<128x128xbf16, #tpu.memory_space<vmem>>, %arg2: memref<128x128xbf16, #tpu.memory_space<vmem>>, %arg3: memref<64x128xf32, #tpu.memory_space<vmem>>) attributes {dimension_semantics = [#tpu.dimension_semantics<parallel>], iteration_bounds = array<i64: 2>, scalar_prefetch = 0 : i64, scratch_operands = 0 : i64, tpu.core_type = #tpu.core_type<tc>, window_params = [{transform_indices = @transform_0, window_bounds = array<i64: 128, 128>}, {pipeline_mode = #tpu.pipeline_mode<synchronous>, transform_indices = @transform_1, window_bounds = array<i64: 128, 128>}, {transform_indices = @transform_2, window_bounds = array<i64: 64, 128>}]} {
    %c0 = arith.constant 0 : index
    %c0_0 = arith.constant 0 : index
    %0 = vector.load %arg1[%c0, %c0_0] : memref<128x128xbf16, #tpu.memory_space<vmem>>, vector<128x128xbf16>
    %c0_1 = arith.constant 0 : index
    %c0_2 = arith.constant 0 : index
    %1 = vector.load %arg2[%c0_1, %c0_2] : memref<128x128xbf16, #tpu.memory_space<vmem>>, vector<128x128xbf16>
    %cst = arith.constant dense<0.000000e+00> : vector<128x128xf32>
    %2 = tpu.matmul %0, %1, %cst {dimension_numbers = #tpu.dot_dimension_numbers<[1], [0], [0], [1], [0, 0, 1, 1], [], []>} : vector<128x128xbf16>, vector<128x128xbf16>, vector<128x128xf32> -> vector<128x128xf32>
    %3 = vector.extract_strided_slice %2 {offsets = [0, 0], sizes = [64, 128], strides = [1, 1]} : vector<128x128xf32> to vector<64x128xf32>
    %4 = vector.extract_strided_slice %2 {offsets = [64, 0], sizes = [64, 128], strides = [1, 1]} : vector<128x128xf32> to vector<64x128xf32>
    %5 = arith.mulf %3, %3 : vector<64x128xf32>
    %cst_3 = arith.constant dense<0.000000e+00> : vector<64xf32>
    %6 = vector.multi_reduction <add>, %5, %cst_3 [1] : vector<64x128xf32> to vector<64xf32>
    %7 = vector.shape_cast %6 : vector<64xf32> to vector<64x1xf32>
    %cst_4 = arith.constant 1.000000e+00 : f32
    %8 = vector.broadcast %cst_4 : f32 to vector<64x1xf32>
    %9 = arith.addf %8, %7 : vector<64x1xf32>
    %10 = tpu.reciprocal %9 {approx = true} : vector<64x1xf32> -> vector<64x1xf32>
    %11 = arith.mulf %7, %10 : vector<64x1xf32>
    %cst_5 = arith.constant 9.99999996E-13 : f32
    %12 = vector.broadcast %cst_5 : f32 to vector<64x1xf32>
    %13 = arith.addf %7, %12 : vector<64x1xf32>
    %14 = math.rsqrt %13 : vector<64x1xf32>
    %15 = arith.mulf %11, %14 : vector<64x1xf32>
    %16 = vector.broadcast %15 : vector<64x1xf32> to vector<64x128xf32>
    %17 = arith.mulf %16, %3 : vector<64x128xf32>
    %18 = arith.mulf %4, %3 : vector<64x128xf32>
    %19 = arith.mulf %17, %18 : vector<64x128xf32>
    %20 = arith.addf %3, %19 : vector<64x128xf32>
    %21 = arith.mulf %20, %20 : vector<64x128xf32>
    %cst_6 = arith.constant dense<0.000000e+00> : vector<64xf32>
    %22 = vector.multi_reduction <add>, %21, %cst_6 [1] : vector<64x128xf32> to vector<64xf32>
    %23 = vector.shape_cast %22 : vector<64xf32> to vector<64x1xf32>
    %cst_7 = arith.constant 1.000000e+00 : f32
    %24 = vector.broadcast %cst_7 : f32 to vector<64x1xf32>
    %25 = arith.addf %24, %23 : vector<64x1xf32>
    %26 = tpu.reciprocal %25 {approx = true} : vector<64x1xf32> -> vector<64x1xf32>
    %27 = arith.mulf %23, %26 : vector<64x1xf32>
    %cst_8 = arith.constant 9.99999996E-13 : f32
    %28 = vector.broadcast %cst_8 : f32 to vector<64x1xf32>
    %29 = arith.addf %23, %28 : vector<64x1xf32>
    %30 = math.rsqrt %29 : vector<64x1xf32>
    %31 = arith.mulf %27, %30 : vector<64x1xf32>
    %32 = vector.broadcast %31 : vector<64x1xf32> to vector<64x128xf32>
    %33 = arith.mulf %32, %20 : vector<64x128xf32>
    %34 = arith.mulf %4, %20 : vector<64x128xf32>
    %35 = arith.mulf %33, %34 : vector<64x128xf32>
    %36 = arith.addf %3, %35 : vector<64x128xf32>
    %37 = arith.mulf %36, %36 : vector<64x128xf32>
    %cst_9 = arith.constant dense<0.000000e+00> : vector<64xf32>
    %38 = vector.multi_reduction <add>, %37, %cst_9 [1] : vector<64x128xf32> to vector<64xf32>
    %39 = vector.shape_cast %38 : vector<64xf32> to vector<64x1xf32>
    %cst_10 = arith.constant 1.000000e+00 : f32
    %40 = vector.broadcast %cst_10 : f32 to vector<64x1xf32>
    %41 = arith.addf %40, %39 : vector<64x1xf32>
    %42 = tpu.reciprocal %41 {approx = true} : vector<64x1xf32> -> vector<64x1xf32>
    %43 = arith.mulf %39, %42 : vector<64x1xf32>
    %cst_11 = arith.constant 9.99999996E-13 : f32
    %44 = vector.broadcast %cst_11 : f32 to vector<64x1xf32>
    %45 = arith.addf %39, %44 : vector<64x1xf32>
    %46 = math.rsqrt %45 : vector<64x1xf32>
    %47 = arith.mulf %43, %46 : vector<64x1xf32>
    %48 = vector.broadcast %47 : vector<64x1xf32> to vector<64x128xf32>
    %49 = arith.mulf %48, %36 : vector<64x128xf32>
    %c0_12 = arith.constant 0 : index
    %c0_13 = arith.constant 0 : index
    %50 = vector.load %arg3[%c0_12, %c0_13] : memref<64x128xf32, #tpu.memory_space<vmem>>, vector<64x128xf32>
    tpu.vector_store %arg3[%c0_12, %c0_13], %49 {strides = array<i32>} : memref<64x128xf32, #tpu.memory_space<vmem>>, vector<64x128xf32>,
    return
  }
  func.func @transform_0(%arg0: i32) -> (i32, i32) {
    %c0_i32 = arith.constant 0 : i32
    %c0_i32_0 = arith.constant 0 : i32
    return %arg0, %c0_i32 : i32, i32
  }
  func.func @transform_1(%arg0: i32) -> (i32, i32) {
    %c0_i32 = arith.constant 0 : i32
    %c0_i32_0 = arith.constant 0 : i32
    %c0_i32_1 = arith.constant 0 : i32
    return %c0_i32, %c0_i32_0 : i32, i32
  }
  func.func @transform_2(%arg0: i32) -> (i32, i32) {
    %c0_i32 = arith.constant 0 : i32
    %c0_i32_0 = arith.constant 0 : i32
    return %arg0, %c0_i32 : i32, i32
  }
}

</mosaic_0001>

<llo_original>
// kernel: tpu_custom_call.1
$region0: #{tpu_custom_call.1}
  #allocation0 [shape = 'u32[]', space=smem, size = 0x4, offset = 0x4, fixed_abs, tag = 'smem constant byte address 0x4 - core index']
  #allocation1 [shape = 'u32[144,128]{1,0:T(1,128)}', space=vmem, size = 0x12000, scoped, tag = 'internal scratch']
  %s0 = inlined_call_operand.hbm [shape: bf16[256,128], index: 0, kind: input, shape index: {}]
  %s1 = inlined_call_operand.hbm [shape: bf16[128,128], index: 1, kind: input, shape index: {}]
  %s2 = inlined_call_operand.hbm [shape: f32[128,128], index: 2, kind: output, shape index: {}]
  %s3 = sld [smem:[#allocation0]]
  $region49: #{tpu_custom_call.1} parent=0
    _
  %s5 = ssub.s32 1, %s3
  %s6 = scalar_select 0, %s5, %s3
  $region1: #{tpu_custom_call.1} parent=0
    #allocation2 [shape = 'u8[65536]{0}', space=vmem, size = 0x10000, scoped, tag = 'input window, operand 0']
    #allocation3 [shape = 's32[2]{0}', space=sflag, size = 0x8, scoped, tag = 'scoped memory for tpu_custom_call.1']
    #allocation4 [shape = 's32[2]{0}', space=sflag, size = 0x8, scoped, tag = 'scoped memory for tpu_custom_call.1']
    #allocation5 [shape = 'u8[32768]{0}', space=vmem, size = 0x8000, scoped, tag = 'input window, operand 1, single buffered']
    #allocation6 [shape = 's32[1]{0}', space=sflag, size = 0x4, scoped, tag = 'scoped memory for tpu_custom_call.1']
    #allocation7 [shape = 'u8[65536]{0}', space=vmem, size = 0x10000, scoped, tag = 'output window, operand 0']
    %7 = vsyncpa [#allocation3], 0
    %s8 = scalar_lea.sflag [#allocation3], 1
    %9 = vsyncpa %s8, 0
    %10 = vsyncpa [#allocation6], 0
    %11 = vsyncpa [#allocation4], 0
    %s12 = scalar_lea.sflag [#allocation4], 1
    %13 = vsyncpa %s12, 0
    loop: start=0, step=1, limit=4
    $region2: #{tpu_custom_call.1} parent=1 // loop_pre_header
      _
    $region3: #{tpu_custom_call.1} parent=1 // loop_header
      %s15 = sphi 0, %s19
      %p16 = scmp.ge.s32.totalorder %s15, 4
      %s25 = sphi 0, %s27
      %s28 = sphi 0, %s25
      %s29 = sphi 0, %s28
      %s45 = sphi 0, %s29
      %s49 = sphi 0, %s49
      %s51 = sphi 0, %s49
      %s52 = sphi 0, %s51
      %s66 = sphi 0, %s52
      %s72 = sphi 0, %s74
      %s75 = sphi 0, %s72
      %s76 = sphi 0, %s75
      %s92 = sphi 0, %s76
    $region4: #{tpu_custom_call.1} parent=1 // loop_header_branch
      %18 = sbr.rel (%p16) target = $region8
    $region5: #{tpu_custom_call.1} parent=1 // loop_body
      %s20 = ssub.s32 %s15, 1
      %s21 = ssub.s32 %s15, 2
      %s22 = sadd.s32 %s15, 1
      %s23 = ssub.s32 %s15, %s22
      %p24 = scmp.eq.s32.totalorder %s23, 0
      %s26 = sadd.s32 %s25, 1
      %s27 = scalar_select %p24, %s25, %s26
      %p30 = pneg %p24
      %p31 = scmp.eq.s32.totalorder %s15, 1
      %p32 = por %p30, %p31
      %p33 = scmp.ne.s32.totalorder %s25, %s28
      %p34 = scmp.eq.s32.totalorder %s15, 0
      %p35 = por %p33, %p34
      %p36 = scmp.ne.s32.totalorder %s25, %s28
      %p37 = scmp.eq.s32.totalorder %s20, 1
      %p38 = por %p36, %p37
      %p39 = scmp.ne.s32.totalorder %s28, %s29
      %p40 = scmp.eq.s32.totalorder %s20, 0
      %p41 = por %p39, %p40
      %p42 = scmp.ne.s32.totalorder %s28, %s29
      %p43 = scmp.eq.s32.totalorder %s21, 1
      %p44 = por %p42, %p43
      %p46 = scmp.ne.s32.totalorder %s29, %s45
      %p47 = scmp.eq.s32.totalorder %s21, 0
      %p48 = por %p46, %p47
      %s50 = sadd.s32 %s49, 1
      %p53 = scmp.eq.s32.totalorder %s15, 1
      %p54 = scmp.ne.s32.totalorder %s49, %s51
      %p55 = scmp.eq.s32.totalorder %s15, 0
      %p56 = por %p54, %p55
      %p57 = scmp.ne.s32.totalorder %s49, %s51
      %p58 = scmp.eq.s32.totalorder %s20, 1
      %p59 = por %p57, %p58
      %p60 = scmp.ne.s32.totalorder %s51, %s52
      %p61 = scmp.eq.s32.totalorder %s20, 0
      %p62 = por %p60, %p61
      %p63 = scmp.ne.s32.totalorder %s51, %s52
      %p64 = scmp.eq.s32.totalorder %s21, 1
      %p65 = por %p63, %p64
      %p67 = scmp.ne.s32.totalorder %s52, %s66
      %p68 = scmp.eq.s32.totalorder %s21, 0
      %p69 = por %p67, %p68
      %s70 = ssub.s32 %s15, %s22
      %p71 = scmp.eq.s32.totalorder %s70, 0
      %s73 = sadd.s32 %s72, 1
      %s74 = scalar_select %p71, %s72, %s73
      %p77 = pneg %p71
      %p78 = scmp.eq.s32.totalorder %s15, 1
      %p79 = por %p77, %p78
      %p80 = scmp.ne.s32.totalorder %s72, %s75
      %p81 = scmp.eq.s32.totalorder %s15, 0
      %p82 = por %p80, %p81
      %p83 = scmp.ne.s32.totalorder %s72, %s75
      %p84 = scmp.eq.s32.totalorder %s20, 1
      %p85 = por %p83, %p84
      %p86 = scmp.ne.s32.totalorder %s75, %s76
      %p87 = scmp.eq.s32.totalorder %s20, 0
      %p88 = por %p86, %p87
      %p89 = scmp.ne.s32.totalorder %s75, %s76
      %p90 = scmp.eq.s32.totalorder %s21, 1
      %p91 = por %p89, %p90
      %p93 = scmp.ne.s32.totalorder %s76, %s92
      %p94 = scmp.eq.s32.totalorder %s21, 0
      %p95 = por %p93, %p94
      %p96 = scmp.le.s32.totalorder 1, %s15
      %p97 = scmp.lt.s32.totalorder %s15, 3
      %p98 = pnand %p96, %p97
      %p99 = pneg %p98
      // Predicated region
      $region9: #{tpu_custom_call.1} parent=5 // pred_check
        _
      $region10: #{tpu_custom_call.1} parent=5 // pred_check_branch
        %101 = sbr.rel (%p98) target = $region12
      $region11: #{tpu_custom_call.1} parent=5 // pred_region
        %s102 = ssub.s32 %s15, 1
        // Predicated region
        $region13: #{tpu_custom_call.1} parent=11 // pred_check
          %p103 = pneg %p62
        $region14: #{tpu_custom_call.1} parent=11 // pred_check_branch
          %105 = sbr.rel (%p103) target = $region16
        $region15: #{tpu_custom_call.1} parent=11 // pred_region
          %s107 = ssub.s32 1024, 1024
          %108 = vsyncadd [#allocation6], %s107
          %s109 = sshll.u32 [#allocation5], 4
          %s110 = int_to_ptr.vmem [resolvable:$true] %s109
          %115 = dma.hbm_to_vmem [thread:$0]  %s1, 1024, %s110, [#allocation6], 64, 64, 4
        $region16: #{tpu_custom_call.1} parent=11 // pred_fallthru
          _
      $region12: #{tpu_custom_call.1} parent=5 // pred_fallthru
        _
      %p116 = scmp.lt.s32.totalorder %s15, 2
      // Predicated region
      $region17: #{tpu_custom_call.1} parent=5 // pred_check
        %p117 = pneg %p116
      $region18: #{tpu_custom_call.1} parent=5 // pred_check_branch
        %119 = sbr.rel (%p117) target = $region20
      $region19: #{tpu_custom_call.1} parent=5 // pred_region
        // Predicated region
        $region21: #{tpu_custom_call.1} parent=19 // pred_check
          %p120 = pneg %p35
        $region22: #{tpu_custom_call.1} parent=19 // pred_check_branch
          %122 = sbr.rel (%p120) target = $region24
        $region23: #{tpu_custom_call.1} parent=19 // pred_region
          %s123 = sand.u32 %s25, 1
          %s124 = scalar_lea.sflag [#allocation3], %s123
          %s125 = sand.u32 %s25, 1
          %s126 = smul.addr %s125, 64
          %s127 = scalar_lea.vmem [#allocation2], %s126
          %s128 = smul.u32 16, %s15
          %s130 = ssub.s32 1024, 1024
          %131 = vsyncadd %s124, %s130
          %s132 = smul.addr %s128, 64
          %s133 = scalar_lea.hbm %s0, %s132
          %s134 = sshll.u32 %s127, 4
          %s135 = int_to_ptr.vmem [resolvable:$true] %s134
          %140 = dma.hbm_to_vmem [thread:$0]  %s133, 1024, %s135, %s124, 64, 64, 4
        $region24: #{tpu_custom_call.1} parent=19 // pred_fallthru
          _
      $region20: #{tpu_custom_call.1} parent=5 // pred_fallthru
        _
      %p141 = scmp.le.s32.totalorder 1, %s15
      %p142 = scmp.lt.s32.totalorder %s15, 3
      %p143 = pnand %p141, %p142
      %p144 = pneg %p143
      // Predicated region
      $region25: #{tpu_custom_call.1} parent=5 // pred_check
        _
      $region26: #{tpu_custom_call.1} parent=5 // pred_check_branch
        %146 = sbr.rel (%p143) target = $region28
      $region27: #{tpu_custom_call.1} parent=5 // pred_region
        %s147 = ssub.s32 %s15, 1
        %s148 = sand.u32 %s28, 1
        %s149 = scalar_lea.sflag [#allocation3], %s148
        %s150 = sand.u32 %s28, 1
        %s151 = smul.addr %s150, 64
        %s152 = scalar_lea.vmem [#allocation2], %s151
        // Predicated region
        $region29: #{tpu_custom_call.1} parent=27 // pred_check
          %p153 = pneg %p41
        $region30: #{tpu_custom_call.1} parent=27 // pred_check_branch
          %155 = sbr.rel (%p153) target = $region32
        $region31: #{tpu_custom_call.1} parent=27 // pred_region
          %156 = dma.done %s149, 1024
        $region32: #{tpu_custom_call.1} parent=27 // pred_fallthru
          _
        // Predicated region
        $region33: #{tpu_custom_call.1} parent=27 // pred_check
          %p157 = pneg %p62
        $region34: #{tpu_custom_call.1} parent=27 // pred_check_branch
          %159 = sbr.rel (%p157) target = $region36
        $region35: #{tpu_custom_call.1} parent=27 // pred_region
          %160 = dma.done [#allocation6], 1024
        $region36: #{tpu_custom_call.1} parent=27 // pred_fallthru
          _
        %s161 = sand.u32 %s28, 1
        %s162 = scalar_lea.sflag [#allocation3], %s161
        %s163 = sand.u32 %s28, 1
        %s164 = smul.addr %s163, 64
        %s165 = scalar_lea.vmem [#allocation2], %s164
        %p166 = pneg %p41
        %p167 = pneg %p38
        %p168 = pneg %p62
        %p169 = pneg %p59
        %p170 = pneg %p88
        %p171 = pneg %p85
        %s172 = sand.u32 %s75, 1
        %s173 = scalar_lea.sflag [#allocation4], %s172
        %s174 = sand.u32 %s75, 1
        %s175 = smul.addr %s174, 64
        %s176 = scalar_lea.vmem [#allocation7], %s175
        %s177 = smul.u32 16, %s20
        %s178 = smul.u32 8, %s20
        %v180 = vld [vmem:[%s152] sm:$0xf]
        %v181 = vld [vmem:[%s152 + $0x4] sm:$0xf]
        %v182 = vld [vmem:[%s152 + $0x8] sm:$0xf]
        %v183 = vld [vmem:[%s152 + $0xc] sm:$0xf]
        %v184 = vld [vmem:[%s152 + $0x10] sm:$0xf]
        %v185 = vld [vmem:[%s152 + $0x14] sm:$0xf]
        %v186 = vld [vmem:[%s152 + $0x18] sm:$0xf]
        %v187 = vld [vmem:[%s152 + $0x1c] sm:$0xf]
        %v188 = vld [vmem:[%s152 + $0x20] sm:$0xf]
        %v189 = vld [vmem:[%s152 + $0x24] sm:$0xf]
        %v190 = vld [vmem:[%s152 + $0x28] sm:$0xf]
        %v191 = vld [vmem:[%s152 + $0x2c] sm:$0xf]
        %v192 = vld [vmem:[%s152 + $0x30] sm:$0xf]
        %v193 = vld [vmem:[%s152 + $0x34] sm:$0xf]
        %v194 = vld [vmem:[%s152 + $0x38] sm:$0xf]
        %v195 = vld [vmem:[%s152 + $0x3c] sm:$0xf]
        %v196 = vld [vmem:[#allocation5] sm:$0xf]
        %v197 = vld [vmem:[#allocation5 + $0x4] sm:$0xf]
        %v198 = vld [vmem:[#allocation5 + $0x8] sm:$0xf]
        %v199 = vld [vmem:[#allocation5 + $0xc] sm:$0xf]
        %v200 = vld [vmem:[#allocation5 + $0x10] sm:$0xf]
        %v201 = vld [vmem:[#allocation5 + $0x14] sm:$0xf]
        %v202 = vld [vmem:[#allocation5 + $0x18] sm:$0xf]
        %v203 = vld [vmem:[#allocation5 + $0x1c] sm:$0xf]
        %v204 = vld [vmem:[#allocation5 + $0x20] sm:$0xf]
        %v205 = vld [vmem:[#allocation5 + $0x24] sm:$0xf]
        %v206 = vld [vmem:[#allocation5 + $0x28] sm:$0xf]
        %v207 = vld [vmem:[#allocation5 + $0x2c] sm:$0xf]
        %v208 = vld [vmem:[#allocation5 + $0x30] sm:$0xf]
        %v209 = vld [vmem:[#allocation5 + $0x34] sm:$0xf]
        %v210 = vld [vmem:[#allocation5 + $0x38] sm:$0xf]
        %v211 = vld [vmem:[#allocation5 + $0x3c] sm:$0xf]
        %v228 = vunpack.c.l.b16 %v180
        %v229 = vunpack.c.l.b16 %v181
        %v230 = vunpack.c.l.b16 %v182
        %v231 = vunpack.c.l.b16 %v183
        %v232 = vunpack.c.l.b16 %v184
        %v233 = vunpack.c.l.b16 %v185
        %v234 = vunpack.c.l.b16 %v186
        %v235 = vunpack.c.l.b16 %v187
        %v236 = vunpack.c.l.b16 %v188
        %v237 = vunpack.c.l.b16 %v189
        %v238 = vunpack.c.l.b16 %v190
        %v239 = vunpack.c.l.b16 %v191
        %v240 = vunpack.c.l.b16 %v192
        %v241 = vunpack.c.l.b16 %v193
        %v242 = vunpack.c.l.b16 %v194
        %v243 = vunpack.c.l.b16 %v195
        %v244 = vpack.c.b16 %v229, %v228
        %v245 = vpack.c.b16 %v231, %v230
        %v246 = vpack.c.b16 %v233, %v232
        %v247 = vpack.c.b16 %v235, %v234
        %v248 = vpack.c.b16 %v237, %v236
        %v249 = vpack.c.b16 %v239, %v238
        %v250 = vpack.c.b16 %v241, %v240
        %v251 = vpack.c.b16 %v243, %v242
        %v276 = vunpack.c.l.b16 %v196
        %v277 = vunpack.c.l.b16 %v197
        %v278 = vunpack.c.l.b16 %v198
        %v279 = vunpack.c.l.b16 %v199
        %v280 = vunpack.c.l.b16 %v200
        %v281 = vunpack.c.l.b16 %v201
        %v282 = vunpack.c.l.b16 %v202
        %v283 = vunpack.c.l.b16 %v203
        %v284 = vunpack.c.l.b16 %v204
        %v285 = vunpack.c.l.b16 %v205
        %v286 = vunpack.c.l.b16 %v206
        %v287 = vunpack.c.l.b16 %v207
        %v288 = vunpack.c.l.b16 %v208
        %v289 = vunpack.c.l.b16 %v209
        %v290 = vunpack.c.l.b16 %v210
        %v291 = vunpack.c.l.b16 %v211
        %v292 = vpack.c.b16 %v277, %v276
        %v293 = vpack.c.b16 %v279, %v278
        %v294 = vpack.c.b16 %v281, %v280
        %v295 = vpack.c.b16 %v283, %v282
        %v296 = vpack.c.b16 %v285, %v284
        %v297 = vpack.c.b16 %v287, %v286
        %v298 = vpack.c.b16 %v289, %v288
        %v299 = vpack.c.b16 %v291, %v290
        %308 = vmatprep.subr.bf16.mxu0 0
        %309 = vmatpush1.bf16.msra.mxu0 %v292
        %310 = vmatprep.subr.bf16.mxu0 0
        %311 = vmatpush1.bf16.msra.mxu0 %v293
        %312 = vmatprep.subr.bf16.mxu0 0
        %313 = vmatpush1.bf16.msra.mxu0 %v294
        %314 = vmatprep.subr.bf16.mxu0 0
        %315 = vmatpush1.bf16.msra.mxu0 %v295
        %316 = vmatprep.subr.bf16.mxu0 0
        %317 = vmatpush1.bf16.msra.mxu0 %v296
        %318 = vmatprep.subr.bf16.mxu0 0
        %319 = vmatpush1.bf16.msra.mxu0 %v297
        %320 = vmatprep.subr.bf16.mxu0 0
        %321 = vmatpush1.bf16.msra.mxu0 %v298
        %322 = vmatprep.subr.bf16.mxu0 0
        %323 = vmatpush1.bf16.msra.mxu0 %v299
        %324 = vmatprep.subr.bf16.mxu0 0
        %325 = vmatpush1.bf16.msra.mxu0 0
        %326 = vmatprep.subr.bf16.mxu0 0
        %327 = vmatpush1.bf16.msra.mxu0 0
        %328 = vmatprep.subr.bf16.mxu0 0
        %329 = vmatpush1.bf16.msra.mxu0 0
        %330 = vmatprep.subr.bf16.mxu0 0
        %331 = vmatpush1.bf16.msra.mxu0 0
        %332 = vmatprep.subr.bf16.mxu0 0
        %333 = vmatpush1.bf16.msra.mxu0 0
        %334 = vmatprep.subr.bf16.mxu0 0
        %335 = vmatpush1.bf16.msra.mxu0 0
        %336 = vmatprep.subr.bf16.mxu0 0
        %337 = vmatpush1.bf16.msra.mxu0 0
        %338 = vmatprep.subr.bf16.mxu0 0
        %339 = vmatpush1.bf16.msra.mxu0 0
        %340 = vmatprep.mubr.bf16.mxu0 0
        %341 = vmatmul.mubr.bf16.gmra.mrb[0].mxu0 %v244
        %v342 = vpop.f32.mrb[0].mxu0
        %v343 = vadd.f32 0.0, %v342
        %v344 = vpop.f32.mrb[0].mxu0
        %v345 = vpop.f32.mrb[0].mxu0
        %v346 = vadd.f32 0.0, %v345
        %v347 = vpop.f32.mrb[0].mxu0
        %348 = vmatprep.mubr.bf16.mxu0 0
        %349 = vmatmul.mubr.bf16.gmra.mrb[0].mxu0 %v245
        %v350 = vpop.f32.mrb[0].mxu0
        %v351 = vadd.f32 0.0, %v350
        %v352 = vpop.f32.mrb[0].mxu0
        %v353 = vpop.f32.mrb[0].mxu0
        %v354 = vadd.f32 0.0, %v353
        %v355 = vpop.f32.mrb[0].mxu0
        %356 = vmatprep.mubr.bf16.mxu0 0
        %357 = vmatmul.mubr.bf16.gmra.mrb[0].mxu0 %v246
        %v358 = vpop.f32.mrb[0].mxu0
        %v359 = vadd.f32 0.0, %v358
        %v360 = vpop.f32.mrb[0].mxu0
        %v361 = vpop.f32.mrb[0].mxu0
        %v362 = vadd.f32 0.0, %v361
        %v363 = vpop.f32.mrb[0].mxu0
        %364 = vmatprep.mubr.bf16.mxu0 0
        %365 = vmatmul.mubr.bf16.gmra.mrb[0].mxu0 %v247
        %v366 = vpop.f32.mrb[0].mxu0
        %v367 = vadd.f32 0.0, %v366
        %v368 = vpop.f32.mrb[0].mxu0
        %v369 = vpop.f32.mrb[0].mxu0
        %v370 = vadd.f32 0.0, %v369
        %v371 = vpop.f32.mrb[0].mxu0
        %372 = vmatprep.mubr.bf16.mxu0 0
        %373 = vmatmul.mubr.bf16.gmra.mrb[0].mxu0 %v248
        %v374 = vpop.f32.mrb[0].mxu0
        %v375 = vadd.f32 0.0, %v374
        %v376 = vpop.f32.mrb[0].mxu0
        %v377 = vpop.f32.mrb[0].mxu0
        %v378 = vadd.f32 0.0, %v377
        %v379 = vpop.f32.mrb[0].mxu0
        %380 = vmatprep.mubr.bf16.mxu0 0
        %381 = vmatmul.mubr.bf16.gmra.mrb[0].mxu0 %v249
        %v382 = vpop.f32.mrb[0].mxu0
        %v383 = vadd.f32 0.0, %v382
        %v384 = vpop.f32.mrb[0].mxu0
        %v385 = vpop.f32.mrb[0].mxu0
        %v386 = vadd.f32 0.0, %v385
        %v387 = vpop.f32.mrb[0].mxu0
        %388 = vmatprep.mubr.bf16.mxu0 0
        %389 = vmatmul.mubr.bf16.gmra.mrb[0].mxu0 %v250
        %v390 = vpop.f32.mrb[0].mxu0
        %v391 = vadd.f32 0.0, %v390
        %v392 = vpop.f32.mrb[0].mxu0
        %v393 = vpop.f32.mrb[0].mxu0
        %v394 = vadd.f32 0.0, %v393
        %v395 = vpop.f32.mrb[0].mxu0
        %396 = vmatprep.mubr.bf16.mxu0 0
        %397 = vmatmul.mubr.bf16.gmra.mrb[0].mxu0 %v251
        %v398 = vpop.f32.mrb[0].mxu0
        %v399 = vadd.f32 0.0, %v398
        %v400 = vpop.f32.mrb[0].mxu0
        %v401 = vpop.f32.mrb[0].mxu0
        %v402 = vadd.f32 0.0, %v401
        %v403 = vpop.f32.mrb[0].mxu0
        %404 = vdwg.mxu0
        %v405 = vmul.f32 %v343, %v343
        %v406 = vmul.f32 %v346, %v346
        %v407 = vmul.f32 %v351, %v351
        %v408 = vmul.f32 %v354, %v354
        %v409 = vmul.f32 %v359, %v359
        %v410 = vmul.f32 %v362, %v362
        %v411 = vmul.f32 %v367, %v367
        %v412 = vmul.f32 %v370, %v370
        %413 = vadd.xlane.f32.xlu0 %v405
        %v414 = vpop.xlane.xlu0 %413
        %415 = vadd.xlane.f32.xlu0 %v406
        %v416 = vpop.xlane.xlu0 %415
        %417 = vadd.xlane.f32.xlu0 %v407
        %v418 = vpop.xlane.xlu0 %417
        %419 = vadd.xlane.f32.xlu0 %v408
        %v420 = vpop.xlane.xlu0 %419
        %421 = vadd.xlane.f32.xlu0 %v409
        %v422 = vpop.xlane.xlu0 %421
        %423 = vadd.xlane.f32.xlu0 %v410
        %v424 = vpop.xlane.xlu0 %423
        %425 = vadd.xlane.f32.xlu0 %v411
        %v426 = vpop.xlane.xlu0 %425
        %427 = vadd.xlane.f32.xlu0 %v412
        %v428 = vpop.xlane.xlu0 %427
        %v429 = vadd.f32 %v414, 1.0
        %v430 = vadd.f32 %v416, 1.0
        %v431 = vadd.f32 %v418, 1.0
        %v432 = vadd.f32 %v420, 1.0
        %v433 = vadd.f32 %v422, 1.0
        %v434 = vadd.f32 %v424, 1.0
        %v435 = vadd.f32 %v426, 1.0
        %v436 = vadd.f32 %v428, 1.0
        %v437 = vrcp.pop %v429
        %v438 = vrcp.pop %v430
        %v439 = vrcp.pop %v431
        %v440 = vrcp.pop %v432
        %v441 = vrcp.pop %v433
        %v442 = vrcp.pop %v434
        %v443 = vrcp.pop %v435
        %v444 = vrcp.pop %v436
        %v445 = vmul.f32 %v414, %v437
        %v446 = vmul.f32 %v416, %v438
        %v447 = vmul.f32 %v418, %v439
        %v448 = vmul.f32 %v420, %v440
        %v449 = vmul.f32 %v422, %v441
        %v450 = vmul.f32 %v424, %v442
        %v451 = vmul.f32 %v426, %v443
        %v452 = vmul.f32 %v428, %v444
        %v453 = vadd.f32 %v414, 1e-12
        %v454 = vadd.f32 %v416, 1e-12
        %v455 = vadd.f32 %v418, 1e-12
        %v456 = vadd.f32 %v420, 1e-12
        %v457 = vadd.f32 %v422, 1e-12
        %v458 = vadd.f32 %v424, 1e-12
        %v459 = vadd.f32 %v426, 1e-12
        %v460 = vadd.f32 %v428, 1e-12
        %v461 = vrsqrt.pop %v453
        %v462 = vrsqrt.pop %v454
        %v463 = vrsqrt.pop %v455
        %v464 = vrsqrt.pop %v456
        %v465 = vrsqrt.pop %v457
        %v466 = vrsqrt.pop %v458
        %v467 = vrsqrt.pop %v459
        %v468 = vrsqrt.pop %v460
        %v469 = vmul.f32 %v445, %v461
        %v470 = vmul.f32 %v446, %v462
        %v471 = vmul.f32 %v447, %v463
        %v472 = vmul.f32 %v448, %v464
        %v473 = vmul.f32 %v449, %v465
        %v474 = vmul.f32 %v450, %v466
        %v475 = vmul.f32 %v451, %v467
        %v476 = vmul.f32 %v452, %v468
        %v477 = vmul.f32 %v469, %v343
        %v478 = vmul.f32 %v470, %v346
        %v479 = vmul.f32 %v471, %v351
        %v480 = vmul.f32 %v472, %v354
        %v481 = vmul.f32 %v473, %v359
        %v482 = vmul.f32 %v474, %v362
        %v483 = vmul.f32 %v475, %v367
        %v484 = vmul.f32 %v476, %v370
        %v485 = vmul.f32 %v375, %v343
        %v486 = vmul.f32 %v378, %v346
        %v487 = vmul.f32 %v383, %v351
        %v488 = vmul.f32 %v386, %v354
        %v489 = vmul.f32 %v391, %v359
        %v490 = vmul.f32 %v394, %v362
        %v491 = vmul.f32 %v399, %v367
        %v492 = vmul.f32 %v402, %v370
        %v493 = vmul.f32 %v477, %v485
        %v494 = vmul.f32 %v478, %v486
        %v495 = vmul.f32 %v479, %v487
        %v496 = vmul.f32 %v480, %v488
        %v497 = vmul.f32 %v481, %v489
        %v498 = vmul.f32 %v482, %v490
        %v499 = vmul.f32 %v483, %v491
        %v500 = vmul.f32 %v484, %v492
        %v501 = vadd.f32 %v343, %v493
        %v502 = vadd.f32 %v346, %v494
        %v503 = vadd.f32 %v351, %v495
        %v504 = vadd.f32 %v354, %v496
        %v505 = vadd.f32 %v359, %v497
        %v506 = vadd.f32 %v362, %v498
        %v507 = vadd.f32 %v367, %v499
        %v508 = vadd.f32 %v370, %v500
        %v509 = vmul.f32 %v501, %v501
        %v510 = vmul.f32 %v502, %v502
        %v511 = vmul.f32 %v503, %v503
        %v512 = vmul.f32 %v504, %v504
        %v513 = vmul.f32 %v505, %v505
        %v514 = vmul.f32 %v506, %v506
        %v515 = vmul.f32 %v507, %v507
        %v516 = vmul.f32 %v508, %v508
        %517 = vadd.xlane.f32.xlu0 %v509
        %v518 = vpop.xlane.xlu0 %517
        %519 = vadd.xlane.f32.xlu0 %v510
        %v520 = vpop.xlane.xlu0 %519
        %521 = vadd.xlane.f32.xlu0 %v511
        %v522 = vpop.xlane.xlu0 %521
        %523 = vadd.xlane.f32.xlu0 %v512
        %v524 = vpop.xlane.xlu0 %523
        %525 = vadd.xlane.f32.xlu0 %v513
        %v526 = vpop.xlane.xlu0 %525
        %527 = vadd.xlane.f32.xlu0 %v514
        %v528 = vpop.xlane.xlu0 %527
        %529 = vadd.xlane.f32.xlu0 %v515
        %v530 = vpop.xlane.xlu0 %529
        %531 = vadd.xlane.f32.xlu0 %v516
        %v532 = vpop.xlane.xlu0 %531
        %v533 = vadd.f32 %v518, 1.0
        %v534 = vadd.f32 %v520, 1.0
        %v535 = vadd.f32 %v522, 1.0
        %v536 = vadd.f32 %v524, 1.0
        %v537 = vadd.f32 %v526, 1.0
        %v538 = vadd.f32 %v528, 1.0
        %v539 = vadd.f32 %v530, 1.0
        %v540 = vadd.f32 %v532, 1.0
        %v541 = vrcp.pop %v533
        %v542 = vrcp.pop %v534
        %v543 = vrcp.pop %v535
        %v544 = vrcp.pop %v536
        %v545 = vrcp.pop %v537
        %v546 = vrcp.pop %v538
        %v547 = vrcp.pop %v539
        %v548 = vrcp.pop %v540
        %v549 = vmul.f32 %v518, %v541
        %v550 = vmul.f32 %v520, %v542
        %v551 = vmul.f32 %v522, %v543
        %v552 = vmul.f32 %v524, %v544
        %v553 = vmul.f32 %v526, %v545
        %v554 = vmul.f32 %v528, %v546
        %v555 = vmul.f32 %v530, %v547
        %v556 = vmul.f32 %v532, %v548
        %v557 = vadd.f32 %v518, 1e-12
        %v558 = vadd.f32 %v520, 1e-12
        %v559 = vadd.f32 %v522, 1e-12
        %v560 = vadd.f32 %v524, 1e-12
        %v561 = vadd.f32 %v526, 1e-12
        %v562 = vadd.f32 %v528, 1e-12
        %v563 = vadd.f32 %v530, 1e-12
        %v564 = vadd.f32 %v532, 1e-12
        %v565 = vrsqrt.pop %v557
        %v566 = vrsqrt.pop %v558
        %v567 = vrsqrt.pop %v559
        %v568 = vrsqrt.pop %v560
        %v569 = vrsqrt.pop %v561
        %v570 = vrsqrt.pop %v562
        %v571 = vrsqrt.pop %v563
        %v572 = vrsqrt.pop %v564
        %v573 = vmul.f32 %v549, %v565
        %v574 = vmul.f32 %v550, %v566
        %v575 = vmul.f32 %v551, %v567
        %v576 = vmul.f32 %v552, %v568
        %v577 = vmul.f32 %v553, %v569
        %v578 = vmul.f32 %v554, %v570
        %v579 = vmul.f32 %v555, %v571
        %v580 = vmul.f32 %v556, %v572
        %v581 = vmul.f32 %v573, %v501
        %v582 = vmul.f32 %v574, %v502
        %v583 = vmul.f32 %v575, %v503
        %v584 = vmul.f32 %v576, %v504
        %v585 = vmul.f32 %v577, %v505
        %v586 = vmul.f32 %v578, %v506
        %v587 = vmul.f32 %v579, %v507
        %v588 = vmul.f32 %v580, %v508
        %v589 = vmul.f32 %v375, %v501
        %v590 = vmul.f32 %v378, %v502
        %v591 = vmul.f32 %v383, %v503
        %v592 = vmul.f32 %v386, %v504
        %v593 = vmul.f32 %v391, %v505
        %v594 = vmul.f32 %v394, %v506
        %v595 = vmul.f32 %v399, %v507
        %v596 = vmul.f32 %v402, %v508
        %v597 = vmul.f32 %v581, %v589
        %v598 = vmul.f32 %v582, %v590
        %v599 = vmul.f32 %v583, %v591
        %v600 = vmul.f32 %v584, %v592
        %v601 = vmul.f32 %v585, %v593
        %v602 = vmul.f32 %v586, %v594
        %v603 = vmul.f32 %v587, %v595
        %v604 = vmul.f32 %v588, %v596
        %v605 = vadd.f32 %v343, %v597
        %v606 = vadd.f32 %v346, %v598
        %v607 = vadd.f32 %v351, %v599
        %v608 = vadd.f32 %v354, %v600
        %v609 = vadd.f32 %v359, %v601
        %v610 = vadd.f32 %v362, %v602
        %v611 = vadd.f32 %v367, %v603
        %v612 = vadd.f32 %v370, %v604
        %v613 = vmul.f32 %v605, %v605
        %v614 = vmul.f32 %v606, %v606
        %v615 = vmul.f32 %v607, %v607
        %v616 = vmul.f32 %v608, %v608
        %v617 = vmul.f32 %v609, %v609
        %v618 = vmul.f32 %v610, %v610
        %v619 = vmul.f32 %v611, %v611
        %v620 = vmul.f32 %v612, %v612
        %621 = vadd.xlane.f32.xlu0 %v613
        %v622 = vpop.xlane.xlu0 %621
        %623 = vadd.xlane.f32.xlu0 %v614
        %v624 = vpop.xlane.xlu0 %623
        %625 = vadd.xlane.f32.xlu0 %v615
        %v626 = vpop.xlane.xlu0 %625
        %627 = vadd.xlane.f32.xlu0 %v616
        %v628 = vpop.xlane.xlu0 %627
        %629 = vadd.xlane.f32.xlu0 %v617
        %v630 = vpop.xlane.xlu0 %629
        %631 = vadd.xlane.f32.xlu0 %v618
        %v632 = vpop.xlane.xlu0 %631
        %633 = vadd.xlane.f32.xlu0 %v619
        %v634 = vpop.xlane.xlu0 %633
        %635 = vadd.xlane.f32.xlu0 %v620
        %v636 = vpop.xlane.xlu0 %635
        %v637 = vadd.f32 %v622, 1.0
        %v638 = vadd.f32 %v624, 1.0
        %v639 = vadd.f32 %v626, 1.0
        %v640 = vadd.f32 %v628, 1.0
        %v641 = vadd.f32 %v630, 1.0
        %v642 = vadd.f32 %v632, 1.0
        %v643 = vadd.f32 %v634, 1.0
        %v644 = vadd.f32 %v636, 1.0
        %v645 = vrcp.pop %v637
        %v646 = vrcp.pop %v638
        %v647 = vrcp.pop %v639
        %v648 = vrcp.pop %v640
        %v649 = vrcp.pop %v641
        %v650 = vrcp.pop %v642
        %v651 = vrcp.pop %v643
        %v652 = vrcp.pop %v644
        %v653 = vmul.f32 %v622, %v645
        %v654 = vmul.f32 %v624, %v646
        %v655 = vmul.f32 %v626, %v647
        %v656 = vmul.f32 %v628, %v648
        %v657 = vmul.f32 %v630, %v649
        %v658 = vmul.f32 %v632, %v650
        %v659 = vmul.f32 %v634, %v651
        %v660 = vmul.f32 %v636, %v652
        %v661 = vadd.f32 %v622, 1e-12
        %v662 = vadd.f32 %v624, 1e-12
        %v663 = vadd.f32 %v626, 1e-12
        %v664 = vadd.f32 %v628, 1e-12
        %v665 = vadd.f32 %v630, 1e-12
        %v666 = vadd.f32 %v632, 1e-12
        %v667 = vadd.f32 %v634, 1e-12
        %v668 = vadd.f32 %v636, 1e-12
        %v669 = vrsqrt.pop %v661
        %v670 = vrsqrt.pop %v662
        %v671 = vrsqrt.pop %v663
        %v672 = vrsqrt.pop %v664
        %v673 = vrsqrt.pop %v665
        %v674 = vrsqrt.pop %v666
        %v675 = vrsqrt.pop %v667
        %v676 = vrsqrt.pop %v668
        %v677 = vmul.f32 %v653, %v669
        %v678 = vmul.f32 %v654, %v670
        %v679 = vmul.f32 %v655, %v671
        %v680 = vmul.f32 %v656, %v672
        %v681 = vmul.f32 %v657, %v673
        %v682 = vmul.f32 %v658, %v674
        %v683 = vmul.f32 %v659, %v675
        %v684 = vmul.f32 %v660, %v676
        %v685 = vmul.f32 %v677, %v605
        %v686 = vmul.f32 %v678, %v606
        %v687 = vmul.f32 %v679, %v607
        %v688 = vmul.f32 %v680, %v608
        %v689 = vmul.f32 %v681, %v609
        %v690 = vmul.f32 %v682, %v610
        %v691 = vmul.f32 %v683, %v611
        %v692 = vmul.f32 %v684, %v612
        %693 = vst [vmem:[%s176] sm:$0xff] %v685
        %694 = vst [vmem:[%s176 + $0x8] sm:$0xff] %v686
        %695 = vst [vmem:[%s176 + $0x10] sm:$0xff] %v687
        %696 = vst [vmem:[%s176 + $0x18] sm:$0xff] %v688
        %697 = vst [vmem:[%s176 + $0x20] sm:$0xff] %v689
        %698 = vst [vmem:[%s176 + $0x28] sm:$0xff] %v690
        %699 = vst [vmem:[%s176 + $0x30] sm:$0xff] %v691
        %700 = vst [vmem:[%s176 + $0x38] sm:$0xff] %v692
        %s701 = sand.u32 %s75, 1
        %s702 = scalar_lea.sflag [#allocation4], %s701
        %s703 = sand.u32 %s75, 1
        %s704 = smul.addr %s703, 64
        %s705 = scalar_lea.vmem [#allocation7], %s704
        // Predicated region
        $region37: #{tpu_custom_call.1} parent=27 // pred_check
          %p706 = pneg %p85
        $region38: #{tpu_custom_call.1} parent=27 // pred_check_branch
          %708 = sbr.rel (%p706) target = $region40
        $region39: #{tpu_custom_call.1} parent=27 // pred_region
          %s709 = smul.u32 8, %s20
          %s711 = ssub.s32 1024, 1024
          %712 = vsyncadd %s702, %s711
          %s713 = smul.addr %s709, 128
          %s714 = scalar_lea.hbm %s2, %s713
          %s715 = sshll.u32 %s705, 4
          %s716 = int_to_ptr.vmem [resolvable:$true] %s715
          %721 = dma.vmem_to_hbm [thread:$0]  %s716, 1024, %s714, %s702, 128, 128, 8
        $region40: #{tpu_custom_call.1} parent=27 // pred_fallthru
          _
      $region28: #{tpu_custom_call.1} parent=5 // pred_fallthru
        _
      %p722 = scmp.le.s32.totalorder 2, %s15
      // Predicated region
      $region41: #{tpu_custom_call.1} parent=5 // pred_check
        %p723 = pneg %p722
      $region42: #{tpu_custom_call.1} parent=5 // pred_check_branch
        %725 = sbr.rel (%p723) target = $region44
      $region43: #{tpu_custom_call.1} parent=5 // pred_region
        %s726 = ssub.s32 %s15, 2
        // Predicated region
        $region45: #{tpu_custom_call.1} parent=43 // pred_check
          %p727 = pneg %p91
        $region46: #{tpu_custom_call.1} parent=43 // pred_check_branch
          %729 = sbr.rel (%p727) target = $region48
        $region47: #{tpu_custom_call.1} parent=43 // pred_region
          %s730 = sand.u32 %s76, 1
          %s731 = scalar_lea.sflag [#allocation4], %s730
          %s732 = sand.u32 %s76, 1
          %s733 = smul.addr %s732, 64
          %s734 = scalar_lea.vmem [#allocation7], %s733
          %735 = dma.done %s731, 1024
        $region48: #{tpu_custom_call.1} parent=43 // pred_fallthru
          _
      $region44: #{tpu_custom_call.1} parent=5 // pred_fallthru
        _
    $region6: #{tpu_custom_call.1} parent=1 // loop_footer
      %s19 = sadd.s32 1, %s15
    $region7: #{tpu_custom_call.1} parent=1 // loop_footer_branch
      %14 = sbr.rel target = $region3
    $region8: #{tpu_custom_call.1} parent=1 // loop_exit
      _
    %736 = vsyncpa [#allocation3], 1
    %s737 = scalar_lea.sflag [#allocation3], 1
    %738 = vsyncpa %s737, 1
    %739 = vsyncpa [#allocation6], 1
    %740 = vsyncpa [#allocation4], 1
    %s741 = scalar_lea.sflag [#allocation4], 1
    %742 = vsyncpa %s741, 1

</llo_original>
